<compile_context>
chip_gen: v7x
topology: tpu7x:2x2x1
jax: 0.10.0
libtpu: 0.0.40
codegen_flags: <defaults>
</compile_context>

<pallas_src>
import jax
import jax.numpy as jnp
from jax.experimental import pallas as pl
from jax.experimental.pallas import tpu as pltpu


# ---------------------------------------------------------------------------
# Kernel
# ---------------------------------------------------------------------------
def make_harmonic_kernel(in_ch, n_harm, omega0, logspace, include_input):
    m = in_ch * n_harm  # number of sin rows (== number of cos rows)

    def kernel(x_ref, o_ref):
        x = x_ref[...]                                   # (in_ch, TILE) f32
        tn = x.shape[-1]

        # Base angle: omega0 * x (scalar immediate multiply).
        a0 = x if omega0 == 1.0 else x * jnp.float32(omega0)
        s = jnp.sin(a0)                                  # (in_ch, TILE)
        c = jnp.cos(a0)
        sins = [s]
        coss = [c]

        if logspace:
            # freq_k = omega0 * 2^k  ->  angle doubles each harmonic.
            for _ in range(1, n_harm):
                s, c = 2.0 * s * c, 1.0 - 2.0 * s * s
                sins.append(s)
                coss.append(c)
        else:
            # freqs = omega0 * linspace(1, 2^(n-1), n): constant step d.
            if n_harm > 1:
                d = (2.0 ** (n_harm - 1) - 1.0) / (n_harm - 1)
                b = x * jnp.float32(omega0 * d)
                sb = jnp.sin(b)
                cb = jnp.cos(b)
                for _ in range(1, n_harm):
                    s, c = s * cb + c * sb, c * cb - s * sb
                    sins.append(s)
                    coss.append(c)

        # Channel-major, frequency-minor row order (matches
        # (x[..., None] * freqs).view(..., -1)):  row c*n_harm + f.
        sin_all = jnp.stack(sins, axis=1).reshape(m, tn)   # (m, TILE)
        cos_all = jnp.stack(coss, axis=1).reshape(m, tn)   # (m, TILE)
        parts = [sin_all, cos_all]
        if include_input:
            parts.append(x)
        result = jnp.concatenate(parts, axis=0)            # (out_dim, TILE)

        # On-chip transpose (XLU) -> lane-contiguous (TILE, out_dim) store;
        # the HBM side is one contiguous region (out_dim is the full last dim).
        o_ref[...] = result.T

    return kernel


# ---------------------------------------------------------------------------
# Wrapper (glue: flatten, transpose input, pad, tile, reshape back)
# ---------------------------------------------------------------------------
def harmonic_embedding(x, *, n_harmonic_functions=6, omega0=1.0, logspace=True,
                       include_input=True, tile_n=8192):
    in_ch = x.shape[-1]
    batch_shape = x.shape[:-1]
    out_dim = 2 * in_ch * n_harmonic_functions + (in_ch if include_input else 0)

    pts = x.reshape(-1, in_ch).astype(jnp.float32)
    n = pts.shape[0]

    # Large tiles (amortise ~0.35us/grid-step); clamp to the problem size.
    tile_n = max(128, (int(tile_n) // 128) * 128)
    tile = max(128, min(tile_n, pl.cdiv(n, 128) * 128))
    n_pad = pl.cdiv(n, tile) * tile

    # Points on lanes for dense sin/cos: (in_ch, n_pad). Padded tail columns
    # are zeros and are sliced away after the call.
    pts_t = pts.T
    if n_pad != n:
        pts_t = jnp.pad(pts_t, ((0, 0), (0, n_pad - n)))

    kernel = make_harmonic_kernel(in_ch, n_harmonic_functions, float(omega0),
                                  bool(logspace), bool(include_input))

    out = pl.pallas_call(
        kernel,
        out_shape=jax.ShapeDtypeStruct((n_pad, out_dim), jnp.float32),
        grid=(n_pad // tile,),
        in_specs=[pl.BlockSpec((in_ch, tile), lambda i: (0, i))],
        out_specs=pl.BlockSpec((tile, out_dim), lambda i: (i, 0)),
        compiler_params=pltpu.CompilerParams(dimension_semantics=("parallel",)),
    )(pts_t)

    if n_pad != n:
        out = out[:n]
    return out.reshape(*batch_shape, out_dim)


# ---------------------------------------------------------------------------
# Pure-JAX reference (semantics of HarmonicEmbedding.forward)
# ---------------------------------------------------------------------------
def reference_harmonic_embedding(x, *, n_harmonic_functions=6, omega0=1.0,
                                 logspace=True, include_input=True):
    if logspace:
        freqs = 2.0 ** jnp.arange(n_harmonic_functions, dtype=jnp.float32)
    else:
        freqs = jnp.linspace(1.0, 2.0 ** (n_harmonic_functions - 1),
                             n_harmonic_functions, dtype=jnp.float32)
    freqs = omega0 * freqs
    x = x.astype(jnp.float32)
    embed = (x[..., None] * freqs).reshape(*x.shape[:-1], -1)
    parts = [jnp.sin(embed), jnp.cos(embed)]
    if include_input:
        parts.append(x)
    return jnp.concatenate(parts, axis=-1)


if __name__ == "__main__":
    key = jax.random.PRNGKey(0)
    # 200 points (non-multiple of 128) exercises the padded-tail path.
    x = jax.random.normal(key, (2, 100, 3), dtype=jnp.float32)

    out = harmonic_embedding(x)  # defaults: n_harm=6 -> out_dim = 6*2*3 + 3 = 39
    out = jax.block_until_ready(out)

    ref = reference_harmonic_embedding(x)

    assert out.shape == (2, 100, 39), out.shape
    assert out.dtype == jnp.float32
    max_err = float(jnp.max(jnp.abs(out - ref)))
    assert max_err < 2e-3, f"max abs err {max_err}"

    print("KERNEL_OK")
</pallas_src>

<mosaic_0001>
module attributes {stable_mosaic.version = 11 : i64} {
  func.func @kernel(%arg0: i32, %arg1: memref<3x256xf32, #tpu.memory_space<vmem>>, %arg2: memref<256x39xf32, #tpu.memory_space<vmem>>) attributes {dimension_semantics = [#tpu.dimension_semantics<parallel>], iteration_bounds = array<i64: 1>, scalar_prefetch = 0 : i64, scratch_operands = 0 : i64, tpu.core_type = #tpu.core_type<tc>, window_params = [{transform_indices = @transform_0, window_bounds = array<i64: 3, 256>}, {transform_indices = @transform_1, window_bounds = array<i64: 256, 39>}]} {
    %c0 = arith.constant 0 : index
    %c0_0 = arith.constant 0 : index
    %0 = vector.load %arg1[%c0, %c0_0] : memref<3x256xf32, #tpu.memory_space<vmem>>, vector<3x256xf32>
    %1 = math.sin %0 : vector<3x256xf32>
    %2 = math.cos %0 : vector<3x256xf32>
    %cst = arith.constant 2.000000e+00 : f32
    %3 = vector.broadcast %cst : f32 to vector<3x256xf32>
    %4 = arith.mulf %3, %1 : vector<3x256xf32>
    %5 = arith.mulf %4, %2 : vector<3x256xf32>
    %cst_1 = arith.constant 2.000000e+00 : f32
    %6 = vector.broadcast %cst_1 : f32 to vector<3x256xf32>
    %7 = arith.mulf %6, %1 : vector<3x256xf32>
    %8 = arith.mulf %7, %1 : vector<3x256xf32>
    %cst_2 = arith.constant 1.000000e+00 : f32
    %9 = vector.broadcast %cst_2 : f32 to vector<3x256xf32>
    %10 = arith.subf %9, %8 : vector<3x256xf32>
    %cst_3 = arith.constant 2.000000e+00 : f32
    %11 = vector.broadcast %cst_3 : f32 to vector<3x256xf32>
    %12 = arith.mulf %11, %5 : vector<3x256xf32>
    %13 = arith.mulf %12, %10 : vector<3x256xf32>
    %cst_4 = arith.constant 2.000000e+00 : f32
    %14 = vector.broadcast %cst_4 : f32 to vector<3x256xf32>
    %15 = arith.mulf %14, %5 : vector<3x256xf32>
    %16 = arith.mulf %15, %5 : vector<3x256xf32>
    %cst_5 = arith.constant 1.000000e+00 : f32
    %17 = vector.broadcast %cst_5 : f32 to vector<3x256xf32>
    %18 = arith.subf %17, %16 : vector<3x256xf32>
    %cst_6 = arith.constant 2.000000e+00 : f32
    %19 = vector.broadcast %cst_6 : f32 to vector<3x256xf32>
    %20 = arith.mulf %19, %13 : vector<3x256xf32>
    %21 = arith.mulf %20, %18 : vector<3x256xf32>
    %cst_7 = arith.constant 2.000000e+00 : f32
    %22 = vector.broadcast %cst_7 : f32 to vector<3x256xf32>
    %23 = arith.mulf %22, %13 : vector<3x256xf32>
    %24 = arith.mulf %23, %13 : vector<3x256xf32>
    %cst_8 = arith.constant 1.000000e+00 : f32
    %25 = vector.broadcast %cst_8 : f32 to vector<3x256xf32>
    %26 = arith.subf %25, %24 : vector<3x256xf32>
    %cst_9 = arith.constant 2.000000e+00 : f32
    %27 = vector.broadcast %cst_9 : f32 to vector<3x256xf32>
    %28 = arith.mulf %27, %21 : vector<3x256xf32>
    %29 = arith.mulf %28, %26 : vector<3x256xf32>
    %cst_10 = arith.constant 2.000000e+00 : f32
    %30 = vector.broadcast %cst_10 : f32 to vector<3x256xf32>
    %31 = arith.mulf %30, %21 : vector<3x256xf32>
    %32 = arith.mulf %31, %21 : vector<3x256xf32>
    %cst_11 = arith.constant 1.000000e+00 : f32
    %33 = vector.broadcast %cst_11 : f32 to vector<3x256xf32>
    %34 = arith.subf %33, %32 : vector<3x256xf32>
    %cst_12 = arith.constant 2.000000e+00 : f32
    %35 = vector.broadcast %cst_12 : f32 to vector<3x256xf32>
    %36 = arith.mulf %35, %29 : vector<3x256xf32>
    %37 = arith.mulf %36, %34 : vector<3x256xf32>
    %cst_13 = arith.constant 2.000000e+00 : f32
    %38 = vector.broadcast %cst_13 : f32 to vector<3x256xf32>
    %39 = arith.mulf %38, %29 : vector<3x256xf32>
    %40 = arith.mulf %39, %29 : vector<3x256xf32>
    %cst_14 = arith.constant 1.000000e+00 : f32
    %41 = vector.broadcast %cst_14 : f32 to vector<3x256xf32>
    %42 = arith.subf %41, %40 : vector<3x256xf32>
    %43 = vector.shape_cast %1 : vector<3x256xf32> to vector<3x1x256xf32>
    %44 = vector.shape_cast %5 : vector<3x256xf32> to vector<3x1x256xf32>
    %45 = vector.shape_cast %13 : vector<3x256xf32> to vector<3x1x256xf32>
    %46 = vector.shape_cast %21 : vector<3x256xf32> to vector<3x1x256xf32>
    %47 = vector.shape_cast %29 : vector<3x256xf32> to vector<3x1x256xf32>
    %48 = vector.shape_cast %37 : vector<3x256xf32> to vector<3x1x256xf32>
    %49 = tpu.concatenate %43, %44, %45, %46, %47, %48 in 1 : vector<3x1x256xf32>, vector<3x1x256xf32>, vector<3x1x256xf32>, vector<3x1x256xf32>, vector<3x1x256xf32>, vector<3x1x256xf32> -> vector<3x6x256xf32>
    %50 = vector.shape_cast %49 : vector<3x6x256xf32> to vector<18x256xf32>
    %51 = vector.shape_cast %2 : vector<3x256xf32> to vector<3x1x256xf32>
    %52 = vector.shape_cast %10 : vector<3x256xf32> to vector<3x1x256xf32>
    %53 = vector.shape_cast %18 : vector<3x256xf32> to vector<3x1x256xf32>
    %54 = vector.shape_cast %26 : vector<3x256xf32> to vector<3x1x256xf32>
    %55 = vector.shape_cast %34 : vector<3x256xf32> to vector<3x1x256xf32>
    %56 = vector.shape_cast %42 : vector<3x256xf32> to vector<3x1x256xf32>
    %57 = tpu.concatenate %51, %52, %53, %54, %55, %56 in 1 : vector<3x1x256xf32>, vector<3x1x256xf32>, vector<3x1x256xf32>, vector<3x1x256xf32>, vector<3x1x256xf32>, vector<3x1x256xf32> -> vector<3x6x256xf32>
    %58 = vector.shape_cast %57 : vector<3x6x256xf32> to vector<18x256xf32>
    %59 = tpu.concatenate %50, %58, %0 in 0 : vector<18x256xf32>, vector<18x256xf32>, vector<3x256xf32> -> vector<39x256xf32>
    %60 = tpu.transpose %59, [1, 0] : vector<39x256xf32> -> vector<256x39xf32>
    %c0_15 = arith.constant 0 : index
    %c0_16 = arith.constant 0 : index
    %61 = vector.load %arg2[%c0_15, %c0_16] : memref<256x39xf32, #tpu.memory_space<vmem>>, vector<256x39xf32>
    tpu.vector_store %arg2[%c0_15, %c0_16], %60 {strides = array<i32>} : memref<256x39xf32, #tpu.memory_space<vmem>>, vector<256x39xf32>,
    return
  }
  func.func @transform_0(%arg0: i32) -> (i32, i32) {
    %c0_i32 = arith.constant 0 : i32
    %c0_i32_0 = arith.constant 0 : i32
    return %c0_i32, %arg0 : i32, i32
  }
  func.func @transform_1(%arg0: i32) -> (i32, i32) {
    %c0_i32 = arith.constant 0 : i32
    %c0_i32_0 = arith.constant 0 : i32
    return %arg0, %c0_i32 : i32, i32
  }
}

</mosaic_0001>

<llo_original>
// kernel: tpu_custom_call.1
$region0: #{tpu_custom_call.1}
  #allocation0 [shape = 'u32[]', space=smem, size = 0x4, offset = 0x4, fixed_abs, tag = 'smem constant byte address 0x4 - core index']
  #allocation1 [shape = 'u32[144,128]{1,0:T(1,128)}', space=vmem, size = 0x12000, scoped, tag = 'internal scratch']
  %s0 = inlined_call_operand.hbm [shape: f32[3,256], index: 0, kind: input, shape index: {}]
  %s1 = inlined_call_operand.vmem [shape: f32[256,39], index: 1, kind: output, shape index: {}]
  %s2 = sld [smem:[#allocation0]]
  $region18: #{tpu_custom_call.1} parent=0
    _
  %s4 = ssub.s32 1, %s2
  %s5 = scalar_select 0, %s4, %s2
  $region1: #{tpu_custom_call.1} parent=0
    #allocation2 [shape = 'u8[4096]{0}', space=vmem, size = 0x1000, scoped, tag = 'input window, operand 0, single buffered']
    #allocation3 [shape = 's32[1]{0}', space=sflag, size = 0x4, scoped, tag = 'scoped memory for tpu_custom_call.1']
    %6 = vsyncpa [#allocation3], 0
    // Predicated region
    $region2: #{tpu_custom_call.1} parent=1 // pred_check
      _
    $region3: #{tpu_custom_call.1} parent=1 // pred_check_branch
      %8 = sbr.rel (0) target = $region5
    $region4: #{tpu_custom_call.1} parent=1 // pred_region
      %s10 = ssub.s32 128, 128
      %11 = vsyncadd [#allocation3], %s10
      %s13 = sshll.u32 [#allocation2], 4
      %s14 = int_to_ptr.vmem [resolvable:$true] %s13
      %16 = dma.hbm_to_vmem [thread:$0]  %s0, 128, %s14, [#allocation3]
    $region5: #{tpu_custom_call.1} parent=1 // pred_fallthru
      _
    // Predicated region
    $region6: #{tpu_custom_call.1} parent=1 // pred_check
      _
    $region7: #{tpu_custom_call.1} parent=1 // pred_check_branch
      %18 = sbr.rel (0) target = $region9
    $region8: #{tpu_custom_call.1} parent=1 // pred_region
      %19 = dma.done [#allocation3], 128
    $region9: #{tpu_custom_call.1} parent=1 // pred_fallthru
      _
    %v20 = vld [vmem:[#allocation2] sm:$0x77]
    %v21 = vand.u32 2147483647, %v20
    %vm22 = vcmp.le.f32.partialorder %v21, 0.7853982
    %vm23 = vcmp.lt.s32.totalorder %v20, 0
    %v24 = vand.u32 %v20, 2139095040
    %v25 = vshrl.u32 %v24, 23
    %v26 = vsub.s32 %v25, 127
    %v27 = vand.u32 2147483647, %v20
    %v28 = vand.u32 %v27, 8388607
    %v29 = vor.u32 %v28, 8388608
    %v30 = vsub.s32 0, %v29
    %v31 = vadd.s32 %v26, 1
    %vm32 = vcmp.gt.s32.totalorder %v31, 0
    %v33 = vsel %vm32, %v31, 0
    %v34 = vshrl.u32 %v33, 5
    %v35 = vand.u32 %v33, 31
    %v36 = vsub.s32 32, %v35
    %v37 = vshrl.u32 683565275, %v36
    %v38 = vshll.u32 683565275, %v35
    %v39 = vshrl.u32 2475754826, %v36
    %v40 = vor.u32 %v38, %v39
    %v41 = vshll.u32 2475754826, %v35
    %v42 = vshrl.u32 2131351028, %v36
    %v43 = vor.u32 %v41, %v42
    %v44 = vshll.u32 2131351028, %v35
    %v45 = vshrl.u32 2102212464, %v36
    %v46 = vor.u32 %v44, %v45
    %v47 = vshll.u32 2102212464, %v35
    %v48 = vshrl.u32 920167782, %v36
    %v49 = vor.u32 %v47, %v48
    %v50 = vshll.u32 920167782, %v35
    %v51 = vshrl.u32 1326507024, %v36
    %v52 = vor.u32 %v50, %v51
    %vm53 = vcmp.lt.s32.totalorder %v34, 1
    %vm54 = vcmp.lt.s32.totalorder %v34, 2
    %vm55 = vcmp.lt.s32.totalorder %v34, 3
    %vm56 = vcmp.lt.s32.totalorder %v34, 4
    %v57 = vsel %vm53, %v37, %v40
    %v58 = vsel %vm56, %v46, 2102212464
    %v59 = vsel %vm55, %v43, %v58
    %v60 = vsel %vm54, %v57, %v59
    %v61 = vsel %vm53, %v40, %v43
    %v62 = vsel %vm56, %v49, 920167782
    %v63 = vsel %vm55, %v46, %v62
    %v64 = vsel %vm54, %v61, %v63
    %v65 = vsel %vm53, %v43, %v46
    %v66 = vsel %vm56, %v52, 1326507024
    %v67 = vsel %vm55, %v49, %v66
    %v68 = vsel %vm54, %v65, %v67
    %v69 = vshll.u32 %v29, 8
    %v70 = vmul.u32.u64.compose %v69, %v68
    %v71 = vextract.low.u32 %v70
    %v72 = vextract.high.u32 %v70
    %v73 = vmul.u32.u64.compose %v69, %v64
    %v74 = vextract.low.u32 %v73
    %v75 = vextract.high.u32 %v73
    %v76 = vmul.u32 %v69, %v60
    %v77 = vadd.s32 %v72, %v74
    %vm78 = vc.u32 %v72, %v74
    %v79 = vadd.s32 %v75, 1
    %v80 = vsel %vm78, %v79, %v75
    %v81 = vadd.s32 %v76, %v80
    %v82 = vadd.s32 %v81, 536870912
    %v83 = vshrl.u32 %v82, 30
    %v84 = vshll.u32 %v83, 30
    %v85 = vsub.s32 %v81, %v84
    %vm86 = vcmp.lt.s32.totalorder %v85, 0
    %v87 = vsub.s32 0, %v85
    %v88 = vsel %vm86, %v87, %v85
    %v89 = vclz %v88
    %v90 = vsub.s32 %v89, 2
    %vm91 = vcmp.gt.s32.totalorder 0, %v90
    %v92 = vsel %vm91, 0, %v90
    %v93 = vsub.s32 32, %v92
    %v94 = vshll.u32 %v85, %v92
    %v95 = vshrl.u32 %v77, %v93
    %v96 = vor.u32 %v94, %v95
    %v97 = vsub.s32 4294967266, %v92
    %v98 = vadd.s32 %v97, 127
    %v99 = vshll.u32 %v98, 23
    %v100 = vor.u32 4788187, %v99
    %v101 = vand.u32 2147483647, %v100
    %v103 = vcvt.s32.f32 %v96
    %v104 = vmul.f32 %v103, %v101
    %v105 = vxor.u32 %v104, 2147483648
    %v106 = vsel %vm23, %v105, %v104
    %v107 = vsub.s32 4, %v83
    %v108 = vsel %vm23, %v107, %v83
    %v109 = vsel %vm22, %v20, %v106
    %v110 = vsel %vm22, 0, %v108
    %v111 = vcosq.f32.pop %v109
    %v112 = vsinq.f32.pop %v109
    %vm113 = vweird.f32 %v20
    %v114 = vadd.s32 %v110, 3
    %v115 = vand.u32 %v114, 3
    %vm116 = vcmp.lt.s32.totalorder %v115, 2
    %vm117 = vcmp.eq.s32.totalorder %v115, 0
    %v118 = vxor.u32 %v112, 2147483648
    %v119 = vsel %vm117, %v111, %v118
    %vm120 = vcmp.eq.s32.totalorder %v115, 2
    %v121 = vxor.u32 %v111, 2147483648
    %v122 = vsel %vm120, %v121, %v112
    %v123 = vsel %vm116, %v119, %v122
    %v124 = vsel %vm113, nan, %v123
    %v125 = vand.u32 2147483647, %v20
    %vm126 = vcmp.le.f32.partialorder %v125, 0.7853982
    %vm127 = vcmp.lt.s32.totalorder %v20, 0
    %v128 = vand.u32 %v20, 2139095040
    %v129 = vshrl.u32 %v128, 23
    %v130 = vsub.s32 %v129, 127
    %v131 = vand.u32 2147483647, %v20
    %v132 = vand.u32 %v131, 8388607
    %v133 = vor.u32 %v132, 8388608
    %v134 = vsub.s32 0, %v133
    %v135 = vadd.s32 %v130, 1
    %vm136 = vcmp.gt.s32.totalorder %v135, 0
    %v137 = vsel %vm136, %v135, 0
    %v138 = vshrl.u32 %v137, 5
    %v139 = vand.u32 %v137, 31
    %v140 = vsub.s32 32, %v139
    %v141 = vshrl.u32 683565275, %v140
    %v142 = vshll.u32 683565275, %v139
    %v143 = vshrl.u32 2475754826, %v140
    %v144 = vor.u32 %v142, %v143
    %v145 = vshll.u32 2475754826, %v139
    %v146 = vshrl.u32 2131351028, %v140
    %v147 = vor.u32 %v145, %v146
    %v148 = vshll.u32 2131351028, %v139
    %v149 = vshrl.u32 2102212464, %v140
    %v150 = vor.u32 %v148, %v149
    %v151 = vshll.u32 2102212464, %v139
    %v152 = vshrl.u32 920167782, %v140
    %v153 = vor.u32 %v151, %v152
    %v154 = vshll.u32 920167782, %v139
    %v155 = vshrl.u32 1326507024, %v140
    %v156 = vor.u32 %v154, %v155
    %vm157 = vcmp.lt.s32.totalorder %v138, 1
    %vm158 = vcmp.lt.s32.totalorder %v138, 2
    %vm159 = vcmp.lt.s32.totalorder %v138, 3
    %vm160 = vcmp.lt.s32.totalorder %v138, 4
    %v161 = vsel %vm157, %v141, %v144
    %v162 = vsel %vm160, %v150, 2102212464
    %v163 = vsel %vm159, %v147, %v162
    %v164 = vsel %vm158, %v161, %v163
    %v165 = vsel %vm157, %v144, %v147
    %v166 = vsel %vm160, %v153, 920167782
    %v167 = vsel %vm159, %v150, %v166
    %v168 = vsel %vm158, %v165, %v167
    %v169 = vsel %vm157, %v147, %v150
    %v170 = vsel %vm160, %v156, 1326507024
    %v171 = vsel %vm159, %v153, %v170
    %v172 = vsel %vm158, %v169, %v171
    %v173 = vshll.u32 %v133, 8
    %v174 = vmul.u32.u64.compose %v173, %v172
    %v175 = vextract.low.u32 %v174
    %v176 = vextract.high.u32 %v174
    %v177 = vmul.u32.u64.compose %v173, %v168
    %v178 = vextract.low.u32 %v177
    %v179 = vextract.high.u32 %v177
    %v180 = vmul.u32 %v173, %v164
    %v181 = vadd.s32 %v176, %v178
    %vm182 = vc.u32 %v176, %v178
    %v183 = vadd.s32 %v179, 1
    %v184 = vsel %vm182, %v183, %v179
    %v185 = vadd.s32 %v180, %v184
    %v186 = vadd.s32 %v185, 536870912
    %v187 = vshrl.u32 %v186, 30
    %v188 = vshll.u32 %v187, 30
    %v189 = vsub.s32 %v185, %v188
    %vm190 = vcmp.lt.s32.totalorder %v189, 0
    %v191 = vsub.s32 0, %v189
    %v192 = vsel %vm190, %v191, %v189
    %v193 = vclz %v192
    %v194 = vsub.s32 %v193, 2
    %vm195 = vcmp.gt.s32.totalorder 0, %v194
    %v196 = vsel %vm195, 0, %v194
    %v197 = vsub.s32 32, %v196
    %v198 = vshll.u32 %v189, %v196
    %v199 = vshrl.u32 %v181, %v197
    %v200 = vor.u32 %v198, %v199
    %v201 = vsub.s32 4294967266, %v196
    %v202 = vadd.s32 %v201, 127
    %v203 = vshll.u32 %v202, 23
    %v204 = vor.u32 4788187, %v203
    %v205 = vand.u32 2147483647, %v204
    %v207 = vcvt.s32.f32 %v200
    %v208 = vmul.f32 %v207, %v205
    %v209 = vxor.u32 %v208, 2147483648
    %v210 = vsel %vm127, %v209, %v208
    %v211 = vsub.s32 4, %v187
    %v212 = vsel %vm127, %v211, %v187
    %v213 = vsel %vm126, %v20, %v210
    %v214 = vsel %vm126, 0, %v212
    %v215 = vcosq.f32.pop %v213
    %v216 = vsinq.f32.pop %v213
    %vm217 = vweird.f32 %v20
    %v218 = vand.u32 %v214, 3
    %vm219 = vcmp.lt.s32.totalorder %v218, 2
    %vm220 = vcmp.eq.s32.totalorder %v218, 0
    %v221 = vxor.u32 %v216, 2147483648
    %v222 = vsel %vm220, %v215, %v221
    %vm223 = vcmp.eq.s32.totalorder %v218, 2
    %v224 = vxor.u32 %v215, 2147483648
    %v225 = vsel %vm223, %v224, %v216
    %v226 = vsel %vm219, %v222, %v225
    %v227 = vsel %vm217, nan, %v226
    %v228 = vmul.f32 %v124, 2.0
    %v229 = vmul.f32 %v228, %v227
    %v230 = vmul.f32 %v228, %v124
    %v231 = vsub.f32 1.0, %v230
    %v232 = vmul.f32 %v229, 2.0
    %v233 = vmul.f32 %v232, %v231
    %v234 = vmul.f32 %v232, %v229
    %v235 = vsub.f32 1.0, %v234
    %v236 = vmul.f32 %v233, 2.0
    %v237 = vmul.f32 %v236, %v235
    %v238 = vmul.f32 %v236, %v233
    %v239 = vsub.f32 1.0, %v238
    %v240 = vmul.f32 %v237, 2.0
    %v241 = vmul.f32 %v240, %v239
    %v242 = vmul.f32 %v240, %v237
    %v243 = vsub.f32 1.0, %v242
    %v244 = vmul.f32 %v241, 2.0
    %v245 = vmul.f32 %v244, %v243
    %v246 = vmul.f32 %v244, %v241
    %v247 = vsub.f32 1.0, %v246
    %v250 = vunpack.c.l.s4 1966171168
    %v251 = vunpack.c.0.s8 %v250
    %v252 = vlaneseq
    %v253 = vshrl.u32 %v252, 7
    %v254 = vsub.s32 %v251, %v253
    %v255 = vrot.slane %v124, %v254
    %v256 = vcombine.high %v255, %v255
    %v258 = vunpack.c.l.s4 1966171168
    %v259 = vunpack.c.0.s8 %v258
    %v260 = vlaneseq
    %v261 = vshrl.u32 %v260, 7
    %v262 = vsub.s32 %v259, %v261
    %v263 = vrot.slane %v255, %v262
    %v265 = vunpack.c.l.s4 1966171168
    %v266 = vunpack.c.0.s8 %v265
    %v267 = vlaneseq
    %v268 = vshrl.u32 %v267, 7
    %v269 = vsub.s32 %v266, %v268
    %v270 = vrot.slane %v256, %v269
    %v271 = vcombine.high %v263, %v263
    %v274 = vunpack.c.l.s4 1966171168
    %v275 = vunpack.c.0.s8 %v274
    %v276 = vlaneseq
    %v277 = vshrl.u32 %v276, 7
    %v278 = vsub.s32 %v275, %v277
    %v279 = vrot.slane %v229, %v278
    %v280 = vcombine.high %v279, %v279
    %v282 = vunpack.c.l.s4 1966171168
    %v283 = vunpack.c.0.s8 %v282
    %v284 = vlaneseq
    %v285 = vshrl.u32 %v284, 7
    %v286 = vsub.s32 %v283, %v285
    %v287 = vrot.slane %v279, %v286
    %v289 = vunpack.c.l.s4 1966171168
    %v290 = vunpack.c.0.s8 %v289
    %v291 = vlaneseq
    %v292 = vshrl.u32 %v291, 7
    %v293 = vsub.s32 %v290, %v292
    %v294 = vrot.slane %v280, %v293
    %v295 = vcombine.high %v287, %v287
    %v298 = vunpack.c.l.s4 1966171168
    %v299 = vunpack.c.0.s8 %v298
    %v300 = vlaneseq
    %v301 = vshrl.u32 %v300, 7
    %v302 = vsub.s32 %v299, %v301
    %v303 = vrot.slane %v233, %v302
    %v304 = vcombine.high %v303, %v303
    %v306 = vunpack.c.l.s4 1966171168
    %v307 = vunpack.c.0.s8 %v306
    %v308 = vlaneseq
    %v309 = vshrl.u32 %v308, 7
    %v310 = vsub.s32 %v307, %v309
    %v311 = vrot.slane %v303, %v310
    %v313 = vunpack.c.l.s4 1966171168
    %v314 = vunpack.c.0.s8 %v313
    %v315 = vlaneseq
    %v316 = vshrl.u32 %v315, 7
    %v317 = vsub.s32 %v314, %v316
    %v318 = vrot.slane %v304, %v317
    %v319 = vcombine.high %v311, %v311
    %v322 = vunpack.c.l.s4 1966171168
    %v323 = vunpack.c.0.s8 %v322
    %v324 = vlaneseq
    %v325 = vshrl.u32 %v324, 7
    %v326 = vsub.s32 %v323, %v325
    %v327 = vrot.slane %v237, %v326
    %v328 = vcombine.high %v327, %v327
    %v330 = vunpack.c.l.s4 1966171168
    %v331 = vunpack.c.0.s8 %v330
    %v332 = vlaneseq
    %v333 = vshrl.u32 %v332, 7
    %v334 = vsub.s32 %v331, %v333
    %v335 = vrot.slane %v327, %v334
    %v337 = vunpack.c.l.s4 1966171168
    %v338 = vunpack.c.0.s8 %v337
    %v339 = vlaneseq
    %v340 = vshrl.u32 %v339, 7
    %v341 = vsub.s32 %v338, %v340
    %v342 = vrot.slane %v328, %v341
    %v343 = vcombine.high %v335, %v335
    %v346 = vunpack.c.l.s4 1966171168
    %v347 = vunpack.c.0.s8 %v346
    %v348 = vlaneseq
    %v349 = vshrl.u32 %v348, 7
    %v350 = vsub.s32 %v347, %v349
    %v351 = vrot.slane %v241, %v350
    %v352 = vcombine.high %v351, %v351
    %v354 = vunpack.c.l.s4 1966171168
    %v355 = vunpack.c.0.s8 %v354
    %v356 = vlaneseq
    %v357 = vshrl.u32 %v356, 7
    %v358 = vsub.s32 %v355, %v357
    %v359 = vrot.slane %v351, %v358
    %v361 = vunpack.c.l.s4 1966171168
    %v362 = vunpack.c.0.s8 %v361
    %v363 = vlaneseq
    %v364 = vshrl.u32 %v363, 7
    %v365 = vsub.s32 %v362, %v364
    %v366 = vrot.slane %v352, %v365
    %v367 = vcombine.high %v359, %v359
    %v370 = vunpack.c.l.s4 1966171168
    %v371 = vunpack.c.0.s8 %v370
    %v372 = vlaneseq
    %v373 = vshrl.u32 %v372, 7
    %v374 = vsub.s32 %v371, %v373
    %v375 = vrot.slane %v245, %v374
    %v376 = vcombine.high %v375, %v375
    %v378 = vunpack.c.l.s4 1966171168
    %v379 = vunpack.c.0.s8 %v378
    %v380 = vlaneseq
    %v381 = vshrl.u32 %v380, 7
    %v382 = vsub.s32 %v379, %v381
    %v383 = vrot.slane %v375, %v382
    %v385 = vunpack.c.l.s4 1966171168
    %v386 = vunpack.c.0.s8 %v385
    %v387 = vlaneseq
    %v388 = vshrl.u32 %v387, 7
    %v389 = vsub.s32 %v386, %v388
    %v390 = vrot.slane %v376, %v389
    %v391 = vcombine.high %v383, %v383
    %v392 = vlaneseq
    %v393 = vshrl.u32 %v392, 7
    %v394 = vsub.s32 0, %v393
    %v395 = vrot.slane %v263, %v394
    %v396 = vlaneseq
    %v397 = vshrl.u32 %v396, 7
    %v398 = vsub.s32 1, %v397
    %v399 = vrot.slane %v263, %v398
    %v400 = vlaneseq
    %v401 = vshrl.u32 %v400, 7
    %v402 = vsub.s32 0, %v401
    %v403 = vrot.slane %v270, %v402
    %v404 = vlaneseq
    %v405 = vshrl.u32 %v404, 7
    %v406 = vsub.s32 1, %v405
    %v407 = vrot.slane %v270, %v406
    %v408 = vlaneseq
    %v409 = vshrl.u32 %v408, 7
    %v410 = vsub.s32 0, %v409
    %v411 = vrot.slane %v271, %v410
    %v412 = vlaneseq
    %v413 = vshrl.u32 %v412, 7
    %v414 = vsub.s32 1, %v413
    %v415 = vrot.slane %v271, %v414
    %v422 = vlaneseq
    %v423 = vshrl.u32 %v422, 7
    %v424 = vsub.s32 0, %v423
    %v425 = vrot.slane %v287, %v424
    %v426 = vlaneseq
    %v427 = vshrl.u32 %v426, 7
    %v428 = vsub.s32 1, %v427
    %v429 = vrot.slane %v287, %v428
    %v430 = vlaneseq
    %v431 = vshrl.u32 %v430, 7
    %v432 = vsub.s32 0, %v431
    %v433 = vrot.slane %v294, %v432
    %v434 = vlaneseq
    %v435 = vshrl.u32 %v434, 7
    %v436 = vsub.s32 1, %v435
    %v437 = vrot.slane %v294, %v436
    %v438 = vlaneseq
    %v439 = vshrl.u32 %v438, 7
    %v440 = vsub.s32 0, %v439
    %v441 = vrot.slane %v295, %v440
    %v442 = vlaneseq
    %v443 = vshrl.u32 %v442, 7
    %v444 = vsub.s32 1, %v443
    %v445 = vrot.slane %v295, %v444
    %v452 = vlaneseq
    %v453 = vshrl.u32 %v452, 7
    %v454 = vsub.s32 0, %v453
    %v455 = vrot.slane %v311, %v454
    %v456 = vlaneseq
    %v457 = vshrl.u32 %v456, 7
    %v458 = vsub.s32 1, %v457
    %v459 = vrot.slane %v311, %v458
    %v460 = vlaneseq
    %v461 = vshrl.u32 %v460, 7
    %v462 = vsub.s32 0, %v461
    %v463 = vrot.slane %v318, %v462
    %v464 = vlaneseq
    %v465 = vshrl.u32 %v464, 7
    %v466 = vsub.s32 1, %v465
    %v467 = vrot.slane %v318, %v466
    %v468 = vlaneseq
    %v469 = vshrl.u32 %v468, 7
    %v470 = vsub.s32 0, %v469
    %v471 = vrot.slane %v319, %v470
    %v472 = vlaneseq
    %v473 = vshrl.u32 %v472, 7
    %v474 = vsub.s32 1, %v473
    %v475 = vrot.slane %v319, %v474
    %v482 = vlaneseq
    %v483 = vshrl.u32 %v482, 7
    %v484 = vsub.s32 0, %v483
    %v485 = vrot.slane %v335, %v484
    %v486 = vlaneseq
    %v487 = vshrl.u32 %v486, 7
    %v488 = vsub.s32 1, %v487
    %v489 = vrot.slane %v335, %v488
    %v490 = vlaneseq
    %v491 = vshrl.u32 %v490, 7
    %v492 = vsub.s32 0, %v491
    %v493 = vrot.slane %v342, %v492
    %v494 = vlaneseq
    %v495 = vshrl.u32 %v494, 7
    %v496 = vsub.s32 1, %v495
    %v497 = vrot.slane %v342, %v496
    %v498 = vlaneseq
    %v499 = vshrl.u32 %v498, 7
    %v500 = vsub.s32 0, %v499
    %v501 = vrot.slane %v343, %v500
    %v502 = vlaneseq
    %v503 = vshrl.u32 %v502, 7
    %v504 = vsub.s32 1, %v503
    %v505 = vrot.slane %v343, %v504
    %v512 = vlaneseq
    %v513 = vshrl.u32 %v512, 7
    %v514 = vsub.s32 0, %v513
    %v515 = vrot.slane %v359, %v514
    %v516 = vlaneseq
    %v517 = vshrl.u32 %v516, 7
    %v518 = vsub.s32 1, %v517
    %v519 = vrot.slane %v359, %v518
    %v520 = vlaneseq
    %v521 = vshrl.u32 %v520, 7
    %v522 = vsub.s32 0, %v521
    %v523 = vrot.slane %v366, %v522
    %v524 = vlaneseq
    %v525 = vshrl.u32 %v524, 7
    %v526 = vsub.s32 1, %v525
    %v527 = vrot.slane %v366, %v526
    %v528 = vlaneseq
    %v529 = vshrl.u32 %v528, 7
    %v530 = vsub.s32 0, %v529
    %v531 = vrot.slane %v367, %v530
    %v532 = vlaneseq
    %v533 = vshrl.u32 %v532, 7
    %v534 = vsub.s32 1, %v533
    %v535 = vrot.slane %v367, %v534
    %v542 = vlaneseq
    %v543 = vshrl.u32 %v542, 7
    %v544 = vsub.s32 0, %v543
    %v545 = vrot.slane %v383, %v544
    %v546 = vlaneseq
    %v547 = vshrl.u32 %v546, 7
    %v548 = vsub.s32 1, %v547
    %v549 = vrot.slane %v383, %v548
    %v550 = vlaneseq
    %v551 = vshrl.u32 %v550, 7
    %v552 = vsub.s32 0, %v551
    %v553 = vrot.slane %v390, %v552
    %v554 = vlaneseq
    %v555 = vshrl.u32 %v554, 7
    %v556 = vsub.s32 1, %v555
    %v557 = vrot.slane %v390, %v556
    %v558 = vlaneseq
    %v559 = vshrl.u32 %v558, 7
    %v560 = vsub.s32 0, %v559
    %v561 = vrot.slane %v391, %v560
    %v562 = vlaneseq
    %v563 = vshrl.u32 %v562, 7
    %v564 = vsub.s32 1, %v563
    %v565 = vrot.slane %v391, %v564
    %vm572 = vcmask 1040384
    %v573 = vsel %vm572, %v395, %v425
    %v574 = vsel %vm572, %v399, %v429
    %v575 = vsel %vm572, %v403, %v433
    %v576 = vsel %vm572, %v407, %v437
    %v577 = vsel %vm572, %v411, %v441
    %v578 = vsel %vm572, %v415, %v445
    %vm579 = vcmask 1041408
    %v580 = vsel %vm579, %v573, %v455
    %v581 = vsel %vm579, %v574, %v459
    %v582 = vsel %vm579, %v575, %v463
    %v583 = vsel %vm579, %v576, %v467
    %v584 = vsel %vm579, %v577, %v471
    %v585 = vsel %vm579, %v578, %v475
    %vm586 = vcmask 1042432
    %v587 = vsel %vm586, %v580, %v485
    %v588 = vsel %vm586, %v581, %v489
    %v589 = vsel %vm586, %v582, %v493
    %v590 = vsel %vm586, %v583, %v497
    %v591 = vsel %vm586, %v584, %v501
    %v592 = vsel %vm586, %v585, %v505
    %vm593 = vcmask 1043456
    %v594 = vsel %vm593, %v587, %v515
    %v595 = vsel %vm593, %v588, %v519
    %v596 = vsel %vm593, %v589, %v523
    %v597 = vsel %vm593, %v590, %v527
    %v598 = vsel %vm593, %v591, %v531
    %v599 = vsel %vm593, %v592, %v535
    %vm600 = vcmask 1044480
    %v601 = vsel %vm600, %v594, %v545
    %v602 = vsel %vm600, %v595, %v549
    %v603 = vsel %vm600, %v596, %v553
    %v604 = vsel %vm600, %v597, %v557
    %v605 = vsel %vm600, %v598, %v561
    %v606 = vsel %vm600, %v599, %v565
    %v613 = vcombine.low %v601, %v602
    %v614 = vcombine.high %v601, %v602
    %v616 = vunpack.c.l.s4 1983009808
    %v617 = vunpack.c.0.s8 %v616
    %v618 = vlaneseq
    %v619 = vshrl.u32 %v618, 7
    %v620 = vsub.s32 %v617, %v619
    %v621 = vrot.slane %v613, %v620
    %v623 = vunpack.c.l.s4 1983009808
    %v624 = vunpack.c.0.s8 %v623
    %v625 = vlaneseq
    %v626 = vshrl.u32 %v625, 7
    %v627 = vsub.s32 %v624, %v626
    %v628 = vrot.slane %v614, %v627
    %v629 = vcombine.high %v621, %v621
    %v630 = vcombine.low %v603, %v604
    %v631 = vcombine.high %v603, %v604
    %v633 = vunpack.c.l.s4 1983009808
    %v634 = vunpack.c.0.s8 %v633
    %v635 = vlaneseq
    %v636 = vshrl.u32 %v635, 7
    %v637 = vsub.s32 %v634, %v636
    %v638 = vrot.slane %v630, %v637
    %v640 = vunpack.c.l.s4 1983009808
    %v641 = vunpack.c.0.s8 %v640
    %v642 = vlaneseq
    %v643 = vshrl.u32 %v642, 7
    %v644 = vsub.s32 %v641, %v643
    %v645 = vrot.slane %v631, %v644
    %v646 = vcombine.high %v638, %v638
    %v647 = vcombine.low %v605, %v606
    %v648 = vcombine.high %v605, %v606
    %v650 = vunpack.c.l.s4 1983009808
    %v651 = vunpack.c.0.s8 %v650
    %v652 = vlaneseq
    %v653 = vshrl.u32 %v652, 7
    %v654 = vsub.s32 %v651, %v653
    %v655 = vrot.slane %v647, %v654
    %v657 = vunpack.c.l.s4 1983009808
    %v658 = vunpack.c.0.s8 %v657
    %v659 = vlaneseq
    %v660 = vshrl.u32 %v659, 7
    %v661 = vsub.s32 %v658, %v660
    %v662 = vrot.slane %v648, %v661
    %v663 = vcombine.high %v655, %v655
    %v666 = vunpack.c.l.s4 1966171168
    %v667 = vunpack.c.0.s8 %v666
    %v668 = vlaneseq
    %v669 = vshrl.u32 %v668, 7
    %v670 = vsub.s32 %v667, %v669
    %v671 = vrot.slane %v227, %v670
    %v672 = vcombine.high %v671, %v671
    %v674 = vunpack.c.l.s4 1966171168
    %v675 = vunpack.c.0.s8 %v674
    %v676 = vlaneseq
    %v677 = vshrl.u32 %v676, 7
    %v678 = vsub.s32 %v675, %v677
    %v679 = vrot.slane %v671, %v678
    %v681 = vunpack.c.l.s4 1966171168
    %v682 = vunpack.c.0.s8 %v681
    %v683 = vlaneseq
    %v684 = vshrl.u32 %v683, 7
    %v685 = vsub.s32 %v682, %v684
    %v686 = vrot.slane %v672, %v685
    %v687 = vcombine.high %v679, %v679
    %v690 = vunpack.c.l.s4 1966171168
    %v691 = vunpack.c.0.s8 %v690
    %v692 = vlaneseq
    %v693 = vshrl.u32 %v692, 7
    %v694 = vsub.s32 %v691, %v693
    %v695 = vrot.slane %v231, %v694
    %v696 = vcombine.high %v695, %v695
    %v698 = vunpack.c.l.s4 1966171168
    %v699 = vunpack.c.0.s8 %v698
    %v700 = vlaneseq
    %v701 = vshrl.u32 %v700, 7
    %v702 = vsub.s32 %v699, %v701
    %v703 = vrot.slane %v695, %v702
    %v705 = vunpack.c.l.s4 1966171168
    %v706 = vunpack.c.0.s8 %v705
    %v707 = vlaneseq
    %v708 = vshrl.u32 %v707, 7
    %v709 = vsub.s32 %v706, %v708
    %v710 = vrot.slane %v696, %v709
    %v711 = vcombine.high %v703, %v703
    %v714 = vunpack.c.l.s4 1966171168
    %v715 = vunpack.c.0.s8 %v714
    %v716 = vlaneseq
    %v717 = vshrl.u32 %v716, 7
    %v718 = vsub.s32 %v715, %v717
    %v719 = vrot.slane %v235, %v718
    %v720 = vcombine.high %v719, %v719
    %v722 = vunpack.c.l.s4 1966171168
    %v723 = vunpack.c.0.s8 %v722
    %v724 = vlaneseq
    %v725 = vshrl.u32 %v724, 7
    %v726 = vsub.s32 %v723, %v725
    %v727 = vrot.slane %v719, %v726
    %v729 = vunpack.c.l.s4 1966171168
    %v730 = vunpack.c.0.s8 %v729
    %v731 = vlaneseq
    %v732 = vshrl.u32 %v731, 7
    %v733 = vsub.s32 %v730, %v732
    %v734 = vrot.slane %v720, %v733
    %v735 = vcombine.high %v727, %v727
    %v738 = vunpack.c.l.s4 1966171168
    %v739 = vunpack.c.0.s8 %v738
    %v740 = vlaneseq
    %v741 = vshrl.u32 %v740, 7
    %v742 = vsub.s32 %v739, %v741
    %v743 = vrot.slane %v239, %v742
    %v744 = vcombine.high %v743, %v743
    %v746 = vunpack.c.l.s4 1966171168
    %v747 = vunpack.c.0.s8 %v746
    %v748 = vlaneseq
    %v749 = vshrl.u32 %v748, 7
    %v750 = vsub.s32 %v747, %v749
    %v751 = vrot.slane %v743, %v750
    %v753 = vunpack.c.l.s4 1966171168
    %v754 = vunpack.c.0.s8 %v753
    %v755 = vlaneseq
    %v756 = vshrl.u32 %v755, 7
    %v757 = vsub.s32 %v754, %v756
    %v758 = vrot.slane %v744, %v757
    %v759 = vcombine.high %v751, %v751
    %v762 = vunpack.c.l.s4 1966171168
    %v763 = vunpack.c.0.s8 %v762
    %v764 = vlaneseq
    %v765 = vshrl.u32 %v764, 7
    %v766 = vsub.s32 %v763, %v765
    %v767 = vrot.slane %v243, %v766
    %v768 = vcombine.high %v767, %v767
    %v770 = vunpack.c.l.s4 1966171168
    %v771 = vunpack.c.0.s8 %v770
    %v772 = vlaneseq
    %v773 = vshrl.u32 %v772, 7
    %v774 = vsub.s32 %v771, %v773
    %v775 = vrot.slane %v767, %v774
    %v777 = vunpack.c.l.s4 1966171168
    %v778 = vunpack.c.0.s8 %v777
    %v779 = vlaneseq
    %v780 = vshrl.u32 %v779, 7
    %v781 = vsub.s32 %v778, %v780
    %v782 = vrot.slane %v768, %v781
    %v783 = vcombine.high %v775, %v775
    %v786 = vunpack.c.l.s4 1966171168
    %v787 = vunpack.c.0.s8 %v786
    %v788 = vlaneseq
    %v789 = vshrl.u32 %v788, 7
    %v790 = vsub.s32 %v787, %v789
    %v791 = vrot.slane %v247, %v790
    %v792 = vcombine.high %v791, %v791
    %v794 = vunpack.c.l.s4 1966171168
    %v795 = vunpack.c.0.s8 %v794
    %v796 = vlaneseq
    %v797 = vshrl.u32 %v796, 7
    %v798 = vsub.s32 %v795, %v797
    %v799 = vrot.slane %v791, %v798
    %v801 = vunpack.c.l.s4 1966171168
    %v802 = vunpack.c.0.s8 %v801
    %v803 = vlaneseq
    %v804 = vshrl.u32 %v803, 7
    %v805 = vsub.s32 %v802, %v804
    %v806 = vrot.slane %v792, %v805
    %v807 = vcombine.high %v799, %v799
    %v808 = vlaneseq
    %v809 = vshrl.u32 %v808, 7
    %v810 = vsub.s32 0, %v809
    %v811 = vrot.slane %v679, %v810
    %v812 = vlaneseq
    %v813 = vshrl.u32 %v812, 7
    %v814 = vsub.s32 1, %v813
    %v815 = vrot.slane %v679, %v814
    %v816 = vlaneseq
    %v817 = vshrl.u32 %v816, 7
    %v818 = vsub.s32 0, %v817
    %v819 = vrot.slane %v686, %v818
    %v820 = vlaneseq
    %v821 = vshrl.u32 %v820, 7
    %v822 = vsub.s32 1, %v821
    %v823 = vrot.slane %v686, %v822
    %v824 = vlaneseq
    %v825 = vshrl.u32 %v824, 7
    %v826 = vsub.s32 0, %v825
    %v827 = vrot.slane %v687, %v826
    %v828 = vlaneseq
    %v829 = vshrl.u32 %v828, 7
    %v830 = vsub.s32 1, %v829
    %v831 = vrot.slane %v687, %v830
    %v838 = vlaneseq
    %v839 = vshrl.u32 %v838, 7
    %v840 = vsub.s32 0, %v839
    %v841 = vrot.slane %v703, %v840
    %v842 = vlaneseq
    %v843 = vshrl.u32 %v842, 7
    %v844 = vsub.s32 1, %v843
    %v845 = vrot.slane %v703, %v844
    %v846 = vlaneseq
    %v847 = vshrl.u32 %v846, 7
    %v848 = vsub.s32 0, %v847
    %v849 = vrot.slane %v710, %v848
    %v850 = vlaneseq
    %v851 = vshrl.u32 %v850, 7
    %v852 = vsub.s32 1, %v851
    %v853 = vrot.slane %v710, %v852
    %v854 = vlaneseq
    %v855 = vshrl.u32 %v854, 7
    %v856 = vsub.s32 0, %v855
    %v857 = vrot.slane %v711, %v856
    %v858 = vlaneseq
    %v859 = vshrl.u32 %v858, 7
    %v860 = vsub.s32 1, %v859
    %v861 = vrot.slane %v711, %v860
    %v868 = vlaneseq
    %v869 = vshrl.u32 %v868, 7
    %v870 = vsub.s32 0, %v869
    %v871 = vrot.slane %v727, %v870
    %v872 = vlaneseq
    %v873 = vshrl.u32 %v872, 7
    %v874 = vsub.s32 1, %v873
    %v875 = vrot.slane %v727, %v874
    %v876 = vlaneseq
    %v877 = vshrl.u32 %v876, 7
    %v878 = vsub.s32 0, %v877
    %v879 = vrot.slane %v734, %v878
    %v880 = vlaneseq
    %v881 = vshrl.u32 %v880, 7
    %v882 = vsub.s32 1, %v881
    %v883 = vrot.slane %v734, %v882
    %v884 = vlaneseq
    %v885 = vshrl.u32 %v884, 7
    %v886 = vsub.s32 0, %v885
    %v887 = vrot.slane %v735, %v886
    %v888 = vlaneseq
    %v889 = vshrl.u32 %v888, 7
    %v890 = vsub.s32 1, %v889
    %v891 = vrot.slane %v735, %v890
    %v898 = vlaneseq
    %v899 = vshrl.u32 %v898, 7
    %v900 = vsub.s32 0, %v899
    %v901 = vrot.slane %v751, %v900
    %v902 = vlaneseq
    %v903 = vshrl.u32 %v902, 7
    %v904 = vsub.s32 1, %v903
    %v905 = vrot.slane %v751, %v904
    %v906 = vlaneseq
    %v907 = vshrl.u32 %v906, 7
    %v908 = vsub.s32 0, %v907
    %v909 = vrot.slane %v758, %v908
    %v910 = vlaneseq
    %v911 = vshrl.u32 %v910, 7
    %v912 = vsub.s32 1, %v911
    %v913 = vrot.slane %v758, %v912
    %v914 = vlaneseq
    %v915 = vshrl.u32 %v914, 7
    %v916 = vsub.s32 0, %v915
    %v917 = vrot.slane %v759, %v916
    %v918 = vlaneseq
    %v919 = vshrl.u32 %v918, 7
    %v920 = vsub.s32 1, %v919
    %v921 = vrot.slane %v759, %v920
    %v928 = vlaneseq
    %v929 = vshrl.u32 %v928, 7
    %v930 = vsub.s32 0, %v929
    %v931 = vrot.slane %v775, %v930
    %v932 = vlaneseq
    %v933 = vshrl.u32 %v932, 7
    %v934 = vsub.s32 1, %v933
    %v935 = vrot.slane %v775, %v934
    %v936 = vlaneseq
    %v937 = vshrl.u32 %v936, 7
    %v938 = vsub.s32 0, %v937
    %v939 = vrot.slane %v782, %v938
    %v940 = vlaneseq
    %v941 = vshrl.u32 %v940, 7
    %v942 = vsub.s32 1, %v941
    %v943 = vrot.slane %v782, %v942
    %v944 = vlaneseq
    %v945 = vshrl.u32 %v944, 7
    %v946 = vsub.s32 0, %v945
    %v947 = vrot.slane %v783, %v946
    %v948 = vlaneseq
    %v949 = vshrl.u32 %v948, 7
    %v950 = vsub.s32 1, %v949
    %v951 = vrot.slane %v783, %v950
    %v958 = vlaneseq
    %v959 = vshrl.u32 %v958, 7
    %v960 = vsub.s32 0, %v959
    %v961 = vrot.slane %v799, %v960
    %v962 = vlaneseq
    %v963 = vshrl.u32 %v962, 7
    %v964 = vsub.s32 1, %v963
    %v965 = vrot.slane %v799, %v964
    %v966 = vlaneseq
    %v967 = vshrl.u32 %v966, 7
    %v968 = vsub.s32 0, %v967
    %v969 = vrot.slane %v806, %v968
    %v970 = vlaneseq
    %v971 = vshrl.u32 %v970, 7
    %v972 = vsub.s32 1, %v971
    %v973 = vrot.slane %v806, %v972
    %v974 = vlaneseq
    %v975 = vshrl.u32 %v974, 7
    %v976 = vsub.s32 0, %v975
    %v977 = vrot.slane %v807, %v976
    %v978 = vlaneseq
    %v979 = vshrl.u32 %v978, 7
    %v980 = vsub.s32 1, %v979
    %v981 = vrot.slane %v807, %v980
    %v988 = vsel %vm572, %v811, %v841
    %v989 = vsel %vm572, %v815, %v845
    %v990 = vsel %vm572, %v819, %v849
    %v991 = vsel %vm572, %v823, %v853
    %v992 = vsel %vm572, %v827, %v857
    %v993 = vsel %vm572, %v831, %v861
    %v994 = vsel %vm579, %v988, %v871
    %v995 = vsel %vm579, %v989, %v875
    %v996 = vsel %vm579, %v990, %v879
    %v997 = vsel %vm579, %v991, %v883
    %v998 = vsel %vm579, %v992, %v887
    %v999 = vsel %vm579, %v993, %v891
    %v1000 = vsel %vm586, %v994, %v901
    %v1001 = vsel %vm586, %v995, %v905
    %v1002 = vsel %vm586, %v996, %v909
    %v1003 = vsel %vm586, %v997, %v913
    %v1004 = vsel %vm586, %v998, %v917
    %v1005 = vsel %vm586, %v999, %v921
    %v1006 = vsel %vm593, %v1000, %v931
    %v1007 = vsel %vm593, %v1001, %v935
    %v1008 = vsel %vm593, %v1002, %v939
    %v1009 = vsel %vm593, %v1003, %v943
    %v1010 = vsel %vm593, %v1004, %v947
    %v1011 = vsel %vm593, %v1005, %v951
    %v1012 = vsel %vm600, %v1006, %v961
    %v1013 = vsel %vm600, %v1007, %v965
    %v1014 = vsel %vm600, %v1008, %v969
    %v1015 = vsel %vm600, %v1009, %v973
    %v1016 = vsel %vm600, %v1010, %v977
    %v1017 = vsel %vm600, %v1011, %v981
    %v1024 = vcombine.low %v1012, %v1013
    %v1025 = vcombine.high %v1012, %v1013
    %v1027 = vunpack.c.l.s4 1983009808
    %v1028 = vunpack.c.0.s8 %v1027
    %v1029 = vlaneseq
    %v1030 = vshrl.u32 %v1029, 7
    %v1031 = vsub.s32 %v1028, %v1030
    %v1032 = vrot.slane %v1024, %v1031
    %v1034 = vunpack.c.l.s4 1983009808
    %v1035 = vunpack.c.0.s8 %v1034
    %v1036 = vlaneseq
    %v1037 = vshrl.u32 %v1036, 7
    %v1038 = vsub.s32 %v1035, %v1037
    %v1039 = vrot.slane %v1025, %v1038
    %v1040 = vcombine.high %v1032, %v1032
    %v1041 = vcombine.low %v1014, %v1015
    %v1042 = vcombine.high %v1014, %v1015
    %v1044 = vunpack.c.l.s4 1983009808
    %v1045 = vunpack.c.0.s8 %v1044
    %v1046 = vlaneseq
    %v1047 = vshrl.u32 %v1046, 7
    %v1048 = vsub.s32 %v1045, %v1047
    %v1049 = vrot.slane %v1041, %v1048
    %v1051 = vunpack.c.l.s4 1983009808
    %v1052 = vunpack.c.0.s8 %v1051
    %v1053 = vlaneseq
    %v1054 = vshrl.u32 %v1053, 7
    %v1055 = vsub.s32 %v1052, %v1054
    %v1056 = vrot.slane %v1042, %v1055
    %v1057 = vcombine.high %v1049, %v1049
    %v1058 = vcombine.low %v1016, %v1017
    %v1059 = vcombine.high %v1016, %v1017
    %v1061 = vunpack.c.l.s4 1983009808
    %v1062 = vunpack.c.0.s8 %v1061
    %v1063 = vlaneseq
    %v1064 = vshrl.u32 %v1063, 7
    %v1065 = vsub.s32 %v1062, %v1064
    %v1066 = vrot.slane %v1058, %v1065
    %v1068 = vunpack.c.l.s4 1983009808
    %v1069 = vunpack.c.0.s8 %v1068
    %v1070 = vlaneseq
    %v1071 = vshrl.u32 %v1070, 7
    %v1072 = vsub.s32 %v1069, %v1071
    %v1073 = vrot.slane %v1059, %v1072
    %v1074 = vcombine.high %v1066, %v1066
    %v1075 = vcombine.low %v621, %v629
    %v1076 = vcombine.low %v628, %v638
    %v1078 = vunpack.c.l.s4 1983009808
    %v1079 = vunpack.c.0.s8 %v1078
    %v1080 = vlaneseq
    %v1081 = vshrl.u32 %v1080, 7
    %v1082 = vsub.s32 %v1079, %v1081
    %v1083 = vrot.slane %v1075, %v1082
    %v1085 = vunpack.c.l.s4 1983009808
    %v1086 = vunpack.c.0.s8 %v1085
    %v1087 = vlaneseq
    %v1088 = vshrl.u32 %v1087, 7
    %v1089 = vsub.s32 %v1086, %v1088
    %v1090 = vrot.slane %v1076, %v1089
    %v1091 = vcombine.low %v1083, %v1090
    %v1092 = vcombine.high %v1083, %v1090
    %v1093 = vcombine.low %v646, %v645
    %v1094 = vcombine.low %v655, %v663
    %v1096 = vunpack.c.l.s4 1983009808
    %v1097 = vunpack.c.0.s8 %v1096
    %v1098 = vlaneseq
    %v1099 = vshrl.u32 %v1098, 7
    %v1100 = vsub.s32 %v1097, %v1099
    %v1101 = vrot.slane %v1093, %v1100
    %v1103 = vunpack.c.l.s4 1983009808
    %v1104 = vunpack.c.0.s8 %v1103
    %v1105 = vlaneseq
    %v1106 = vshrl.u32 %v1105, 7
    %v1107 = vsub.s32 %v1104, %v1106
    %v1108 = vrot.slane %v1094, %v1107
    %v1109 = vcombine.low %v1101, %v1108
    %v1110 = vcombine.high %v1101, %v1108
    %v1112 = vunpack.c.l.s4 1983009808
    %v1113 = vunpack.c.0.s8 %v1112
    %v1114 = vlaneseq
    %v1115 = vshrl.u32 %v1114, 7
    %v1116 = vsub.s32 %v1113, %v1115
    %v1117 = vrot.slane %v662, %v1116
    %v1118 = vcombine.high %v1117, %v1117
    %v1125 = vcombine.low %v1032, %v1032
    %v1126 = vcombine.low %v1040, %v1039
    %v1128 = vunpack.c.l.s4 1983009808
    %v1129 = vunpack.c.0.s8 %v1128
    %v1130 = vlaneseq
    %v1131 = vshrl.u32 %v1130, 7
    %v1132 = vsub.s32 %v1129, %v1131
    %v1133 = vrot.slane %v1125, %v1132
    %v1135 = vunpack.c.l.s4 1983009808
    %v1136 = vunpack.c.0.s8 %v1135
    %v1137 = vlaneseq
    %v1138 = vshrl.u32 %v1137, 7
    %v1139 = vsub.s32 %v1136, %v1138
    %v1140 = vrot.slane %v1126, %v1139
    %v1141 = vcombine.low %v1133, %v1140
    %v1142 = vcombine.high %v1133, %v1140
    %v1143 = vcombine.low %v1049, %v1057
    %v1144 = vcombine.low %v1056, %v1066
    %v1146 = vunpack.c.l.s4 1983009808
    %v1147 = vunpack.c.0.s8 %v1146
    %v1148 = vlaneseq
    %v1149 = vshrl.u32 %v1148, 7
    %v1150 = vsub.s32 %v1147, %v1149
    %v1151 = vrot.slane %v1143, %v1150
    %v1153 = vunpack.c.l.s4 1983009808
    %v1154 = vunpack.c.0.s8 %v1153
    %v1155 = vlaneseq
    %v1156 = vshrl.u32 %v1155, 7
    %v1157 = vsub.s32 %v1154, %v1156
    %v1158 = vrot.slane %v1144, %v1157
    %v1159 = vcombine.low %v1151, %v1158
    %v1160 = vcombine.high %v1151, %v1158
    %v1161 = vcombine.low %v1074, %v1073
    %v1163 = vunpack.c.l.s4 1983009808
    %v1164 = vunpack.c.0.s8 %v1163
    %v1165 = vlaneseq
    %v1166 = vshrl.u32 %v1165, 7
    %v1167 = vsub.s32 %v1164, %v1166
    %v1168 = vrot.slane %v1161, %v1167
    %v1169 = vcombine.high %v1168, %v1168
    %v1177 = vcombine.low %v20, %v20
    %v1179 = vsel %vm579, %v1117, %v1141
    %v1180 = vsel %vm579, %v1118, %v1142
    %v1181 = vsel %vm593, %v1168, %v1177
    %v1182 = vsel %vm593, %v1169, %v20
    %1183 = vxpose.xlu0.b32.start [1/16] %v1091, 128
    %1184 = vxpose.xlu0.b32.cont [2/16] %v1109, 128
    %1185 = vxpose.xlu0.b32.cont [3/16] %v1179, 128
    %1186 = vxpose.xlu0.b32.cont [4/16] %v1159, 128
    %1187 = vxpose.xlu0.b32.cont [5/16] %v1181, 128
    %1188 = vxpose.xlu0.b32.cont [6/16] 0.0, 128
    %1189 = vxpose.xlu0.b32.cont [7/16] 0.0, 128
    %1190 = vxpose.xlu0.b32.cont [8/16] 0.0, 128
    %1191 = vxpose.xlu0.b32.cont [9/16] 0.0, 128
    %1192 = vxpose.xlu0.b32.cont [10/16] 0.0, 128
    %1193 = vxpose.xlu0.b32.cont [11/16] 0.0, 128
    %1194 = vxpose.xlu0.b32.cont [12/16] 0.0, 128
    %1195 = vxpose.xlu0.b32.cont [13/16] 0.0, 128
    %1196 = vxpose.xlu0.b32.cont [14/16] 0.0, 128
    %1197 = vxpose.xlu0.b32.cont [15/16] 0.0, 128
    %1198 = vxpose.xlu0.b32.end [16/16] 0.0, 128
    %v1199 = vpop.trf.xlu0
    %v1200 = vpop.trf.xlu0
    %v1201 = vpop.trf.xlu0
    %v1202 = vpop.trf.xlu0
    %v1203 = vpop.trf.xlu0
    %v1204 = vpop.trf.xlu0
    %v1205 = vpop.trf.xlu0
    %v1206 = vpop.trf.xlu0
    %v1207 = vpop.trf.xlu0
    %v1208 = vpop.trf.xlu0
    %v1209 = vpop.trf.xlu0
    %v1210 = vpop.trf.xlu0
    %v1211 = vpop.trf.xlu0
    %v1212 = vpop.trf.xlu0
    %v1213 = vpop.trf.xlu0
    %v1214 = vpop.trf.xlu0
    %1215 = vxpose.xlu0.b32.start [1/16] %v1092, 128
    %1216 = vxpose.xlu0.b32.cont [2/16] %v1110, 128
    %1217 = vxpose.xlu0.b32.cont [3/16] %v1180, 128
    %1218 = vxpose.xlu0.b32.cont [4/16] %v1160, 128
    %1219 = vxpose.xlu0.b32.cont [5/16] %v1182, 128
    %1220 = vxpose.xlu0.b32.cont [6/16] 0.0, 128
    %1221 = vxpose.xlu0.b32.cont [7/16] 0.0, 128
    %1222 = vxpose.xlu0.b32.cont [8/16] 0.0, 128
    %1223 = vxpose.xlu0.b32.cont [9/16] 0.0, 128
    %1224 = vxpose.xlu0.b32.cont [10/16] 0.0, 128
    %1225 = vxpose.xlu0.b32.cont [11/16] 0.0, 128
    %1226 = vxpose.xlu0.b32.cont [12/16] 0.0, 128
    %1227 = vxpose.xlu0.b32.cont [13/16] 0.0, 128
    %1228 = vxpose.xlu0.b32.cont [14/16] 0.0, 128
    %1229 = vxpose.xlu0.b32.cont [15/16] 0.0, 128
    %1230 = vxpose.xlu0.b32.end [16/16] 0.0, 128
    %v1231 = vpop.trf.xlu0
    %v1232 = vpop.trf.xlu0
    %v1233 = vpop.trf.xlu0
    %v1234 = vpop.trf.xlu0
    %v1235 = vpop.trf.xlu0
    %v1236 = vpop.trf.xlu0
    %v1237 = vpop.trf.xlu0
    %v1238 = vpop.trf.xlu0
    %v1239 = vpop.trf.xlu0
    %v1240 = vpop.trf.xlu0
    %v1241 = vpop.trf.xlu0
    %v1242 = vpop.trf.xlu0
    %v1243 = vpop.trf.xlu0
    %v1244 = vpop.trf.xlu0
    %v1245 = vpop.trf.xlu0
    %v1246 = vpop.trf.xlu0
    %vm1247 = vcmask 318464
    %1248 = vst.msk [vmem:[%s1] sm:$0xff] %vm1247, %v1199
    %1249 = vst.msk [vmem:[%s1 + $0x8] sm:$0xff] %vm1247, %v1200
    %1250 = vst.msk [vmem:[%s1 + $0x10] sm:$0xff] %vm1247, %v1201
    %1251 = vst.msk [vmem:[%s1 + $0x18] sm:$0xff] %vm1247, %v1202
    %1252 = vst.msk [vmem:[%s1 + $0x20] sm:$0xff] %vm1247, %v1203
    %1253 = vst.msk [vmem:[%s1 + $0x28] sm:$0xff] %vm1247, %v1204
    %1254 = vst.msk [vmem:[%s1 + $0x30] sm:$0xff] %vm1247, %v1205
    %1255 = vst.msk [vmem:[%s1 + $0x38] sm:$0xff] %vm1247, %v1206
    %1256 = vst.msk [vmem:[%s1 + $0x40] sm:$0xff] %vm1247, %v1207
    %1257 = vst.msk [vmem:[%s1 + $0x48] sm:$0xff] %vm1247, %v1208
    %1258 = vst.msk [vmem:[%s1 + $0x50] sm:$0xff] %vm1247, %v1209
    %1259 = vst.msk [vmem:[%s1 + $0x58] sm:$0xff] %vm1247, %v1210
    %1260 = vst.msk [vmem:[%s1 + $0x60] sm:$0xff] %vm1247, %v1211
    %1261 = vst.msk [vmem:[%s1 + $0x68] sm:$0xff] %vm1247, %v1212
    %1262 = vst.msk [vmem:[%s1 + $0x70] sm:$0xff] %vm1247, %v1213
    %1263 = vst.msk [vmem:[%s1 + $0x78] sm:$0xff] %vm1247, %v1214
    %1264 = vst.msk [vmem:[%s1 + $0x80] sm:$0xff] %vm1247, %v1231
    %1265 = vst.msk [vmem:[%s1 + $0x88] sm:$0xff] %vm1247, %v1232
    %1266 = vst.msk [vmem:[%s1 + $0x90] sm:$0xff] %vm1247, %v1233
    %1267 = vst.msk [vmem:[%s1 + $0x98] sm:$0xff] %vm1247, %v1234
    %1268 = vst.msk [vmem:[%s1 + $0xa0] sm:$0xff] %vm1247, %v1235
    %1269 = vst.msk [vmem:[%s1 + $0xa8] sm:$0xff] %vm1247, %v1236
    %1270 = vst.msk [vmem:[%s1 + $0xb0] sm:$0xff] %vm1247, %v1237
    %1271 = vst.msk [vmem:[%s1 + $0xb8] sm:$0xff] %vm1247, %v1238
    %1272 = vst.msk [vmem:[%s1 + $0xc0] sm:$0xff] %vm1247, %v1239
    %1273 = vst.msk [vmem:[%s1 + $0xc8] sm:$0xff] %vm1247, %v1240
    %1274 = vst.msk [vmem:[%s1 + $0xd0] sm:$0xff] %vm1247, %v1241
    %1275 = vst.msk [vmem:[%s1 + $0xd8] sm:$0xff] %vm1247, %v1242
    %1276 = vst.msk [vmem:[%s1 + $0xe0] sm:$0xff] %vm1247, %v1243
    %1277 = vst.msk [vmem:[%s1 + $0xe8] sm:$0xff] %vm1247, %v1244
    %1278 = vst.msk [vmem:[%s1 + $0xf0] sm:$0xff] %vm1247, %v1245
    %1279 = vst.msk [vmem:[%s1 + $0xf8] sm:$0xff] %vm1247, %v1246
    // Predicated region
    $region10: #{tpu_custom_call.1} parent=1 // pred_check
      _
    $region11: #{tpu_custom_call.1} parent=1 // pred_check_branch
      %1281 = sbr.rel (0) target = $region13
    $region12: #{tpu_custom_call.1} parent=1 // pred_region
      _
    $region13: #{tpu_custom_call.1} parent=1 // pred_fallthru
      _
    // Predicated region
    $region14: #{tpu_custom_call.1} parent=1 // pred_check
      _
    $region15: #{tpu_custom_call.1} parent=1 // pred_check_branch
      %1283 = sbr.rel (0) target = $region17
    $region16: #{tpu_custom_call.1} parent=1 // pred_region
      _
    $region17: #{tpu_custom_call.1} parent=1 // pred_fallthru
      _
    %1284 = vsyncpa [#allocation3], 1

</llo_original>
